<compile_context>
chip_gen: v6e
topology: v6e:2x2x1
jax: 0.10.0
libtpu: 0.0.40
codegen_flags: <defaults>
</compile_context>

<pallas_src>
import functools
import math

import jax
import jax.numpy as jnp
from jax.experimental import pallas as pl
from jax.experimental.pallas import tpu as pltpu


def _round_up(x, m):
    return (x + m - 1) // m * m


def _sublane_multiple(dtype):
    # packed sublane minimum: 8 rows for 32-bit, 16 for 16-bit, 32 for 8-bit
    return max(8, 32 // jnp.dtype(dtype).itemsize)


def _vmem_limit_bytes():
    # ~75% of physical VMEM: 128 MiB (v5e/v6e) -> 96 MiB, 64 MiB (v7x) -> 48 MiB.
    try:
        cap = pltpu.get_tpu_info().vmem_capacity_bytes
    except Exception:
        cap = 64 * 1024 * 1024  # conservative fallback (v7x-safe)
    return int(cap * 3 // 4)


def _default_tile_targets(vmem_budget):
    if vmem_budget >= 80 * 1024 * 1024:   # 128 MiB VMEM parts (v5e / v6e)
        return 1024, 1024, 1024           # f32 double-buffered footprint ~28 MiB
    return 512, 512, 1024                 # 64 MiB VMEM parts (v7x), ~11 MiB


def _linear_kernel(x_ref, w_ref, b_ref, o_ref, acc_ref):
    # x_ref: [tm, tk], w_ref: [tk, tn], b_ref: [1, tn], o_ref: [tm, tn]
    k = pl.program_id(2)

    @pl.when(k == 0)
    def _():
        acc_ref[...] = jnp.zeros_like(acc_ref)

    # MXU matmul, f32 accumulation; inner loop is pure matmul + accumulate.
    acc_ref[...] += jnp.dot(
        x_ref[...], w_ref[...], preferred_element_type=jnp.float32
    )

    @pl.when(k == pl.num_programs(2) - 1)
    def _():
        o_ref[...] = (
            acc_ref[...] + b_ref[...].astype(jnp.float32)
        ).astype(o_ref.dtype)


@functools.partial(jax.jit, static_argnames=("tm", "tn", "tk", "n_out"))
def _linear_forward_2d(x2d, w_t, b_row, *, tm, tn, tk, n_out):
    """x2d: [M, K]; w_t: [K_pad, N_pad] (pre-padded, pre-transposed); b_row: [1, N_pad]."""
    M, K = x2d.shape
    K_pad, N_pad = w_t.shape
    M_pad = _round_up(M, tm)

    # Pad x only if the shapes are not already tile-aligned (skips an HBM pass
    # in the common aligned case).
    if (M_pad, K_pad) != (M, K):
        x2d = jnp.pad(x2d, ((0, M_pad - M), (0, K_pad - K)))

    grid = (M_pad // tm, N_pad // tn, K_pad // tk)

    x_bytes = M_pad * K_pad * x2d.dtype.itemsize
    w_bytes = K_pad * N_pad * w_t.dtype.itemsize
    b_bytes = N_pad * b_row.dtype.itemsize
    out_bytes = M_pad * N_pad * x2d.dtype.itemsize
    cost = pl.CostEstimate(
        flops=2 * M_pad * N_pad * K_pad,
        transcendentals=0,
        # actual tiled traffic: x re-read per j block, W/bias re-read per i block
        bytes_accessed=int(
            x_bytes * grid[1] + (w_bytes + b_bytes) * grid[0] + out_bytes
        ),
    )

    out = pl.pallas_call(
        _linear_kernel,
        out_shape=jax.ShapeDtypeStruct((M_pad, N_pad), x2d.dtype),
        grid_spec=pltpu.PrefetchScalarGridSpec(
            num_scalar_prefetch=0,
            grid=grid,
            in_specs=[
                pl.BlockSpec((tm, tk), lambda i, j, k: (i, k)),   # x tile
                pl.BlockSpec((tk, tn), lambda i, j, k: (k, j)),   # W^T tile [K,N]
                pl.BlockSpec((1, tn), lambda i, j, k: (0, j)),    # bias tile
            ],
            out_specs=pl.BlockSpec((tm, tn), lambda i, j, k: (i, j)),
            scratch_shapes=[pltpu.VMEM((tm, tn), jnp.float32)],
        ),
        compiler_params=pltpu.CompilerParams(
            dimension_semantics=("parallel", "parallel", "arbitrary"),
            vmem_limit_bytes=_vmem_limit_bytes(),
        ),
        cost_estimate=cost,
    )(x2d, w_t, b_row)

    if (M_pad, N_pad) != (M, n_out):
        out = out[:M, :n_out]
    return out


class PallasLinear:
    """Caches a padded, [K, N]-layout weight across calls (no per-call pad pass)."""

    def __init__(self, weight, bias, *, compute_dtype=None):
        # weight: [out_features, in_features]; bias: [out_features]
        N, K = weight.shape
        self.N, self.K = N, K
        self.compute_dtype = compute_dtype

        budget = _vmem_limit_bytes()
        tm_t, tn_t, tk_t = _default_tile_targets(budget)
        self.tm_target = tm_t
        self.tn = min(tn_t, _round_up(N, 128))
        self.tk = min(tk_t, _round_up(K, 128))

        N_pad = _round_up(N, self.tn)
        K_pad = _round_up(K, self.tk)

        w_t = weight.T                                        # [K, N] once
        if compute_dtype is not None:
            w_t = w_t.astype(compute_dtype)
        if (K_pad, N_pad) != (K, N):
            w_t = jnp.pad(w_t, ((0, K_pad - K), (0, N_pad - N)))
        b_row = bias if N_pad == N else jnp.pad(bias, (0, N_pad - N))

        self.w_t = jax.device_put(w_t)                        # [K_pad, N_pad]
        self.b_row = jax.device_put(b_row.reshape(1, N_pad))  # [1, N_pad]

    def __call__(self, x):
        orig_shape = x.shape
        if self.compute_dtype is not None:
            x = x.astype(self.compute_dtype)
        x2d = x.reshape(-1, self.K)
        M = x2d.shape[0]

        sub = _sublane_multiple(x2d.dtype)
        tm = min(self.tm_target, _round_up(M, sub))

        # Megacore heuristic (v7x has 2 TCs sharded over the "parallel" axes):
        # if both parallel grid axes would be a single block for a non-tiny M,
        # split M into two blocks.  No effect on single-TC v5e/v6e correctness.
        n_blocks_j = self.w_t.shape[1] // self.tn
        if n_blocks_j == 1 and _round_up(M, tm) // tm == 1 and M >= 512:
            tm = _round_up(-(-M // 2), sub)

        out = _linear_forward_2d(
            x2d, self.w_t, self.b_row,
            tm=tm, tn=self.tn, tk=self.tk, n_out=self.N,
        )
        out = out.astype(orig_shape and x.dtype)
        return out.reshape(*orig_shape[:-1], self.N)


def init_params(key, in_features, out_features, dtype=jnp.float32):
    # nn.init.kaiming_normal_(weight): std = sqrt(2 / fan_in), fan_in = in_features.
    std = math.sqrt(2.0 / in_features)
    weight = std * jax.random.normal(key, (out_features, in_features), dtype=dtype)
    bias = jnp.zeros((out_features,), dtype=dtype)            # nn.init.constant_(bias, 0)
    return weight, bias


if __name__ == "__main__":
    # Small shapes consistent with the module: batch=2, seq=8, hidden 32 -> 64.
    batch, seq, in_features, out_features = 2, 8, 32, 64

    key = jax.random.PRNGKey(0)
    kx, kw = jax.random.split(key)
    x = jax.random.normal(kx, (batch, seq, in_features), dtype=jnp.float32)
    weight, bias = init_params(kw, in_features, out_features)

    # dropout=0.0 in the reference module -> forward is just the affine map.
    linear = PallasLinear(weight, bias)
    y = linear(x)
    y = jax.block_until_ready(y)

    # Sanity check against plain-JAX reference.
    y_ref = x @ weight.T + bias
    assert y.shape == (batch, seq, out_features)
    assert jnp.allclose(y, y_ref, atol=1e-5, rtol=1e-5)

    print("KERNEL_OK")
</pallas_src>

<mosaic_0001>
module attributes {stable_mosaic.version = 11 : i64} {
  func.func @_linear_kernel(%arg0: i32, %arg1: i32, %arg2: i32, %arg3: memref<16x128xf32, #tpu.memory_space<vmem>>, %arg4: memref<128x128xf32, #tpu.memory_space<vmem>>, %arg5: memref<1x128xf32, #tpu.memory_space<vmem>>, %arg6: memref<16x128xf32, #tpu.memory_space<vmem>>, %arg7: memref<16x128xf32, #tpu.memory_space<vmem>>) attributes {dimension_semantics = [#tpu.dimension_semantics<parallel>, #tpu.dimension_semantics<parallel>, #tpu.dimension_semantics<arbitrary>], iteration_bounds = array<i64: 1, 1, 1>, scalar_prefetch = 0 : i64, scratch_operands = 1 : i64, tpu.core_type = #tpu.core_type<tc>, window_params = [{transform_indices = @transform_0, window_bounds = array<i64: 16, 128>}, {transform_indices = @transform_1, window_bounds = array<i64: 128, 128>}, {transform_indices = @transform_2, window_bounds = array<i64: 1, 128>}, {transform_indices = @transform_3, window_bounds = array<i64: 16, 128>}]} {
    %c0_i32 = arith.constant 0 : i32
    %0 = arith.cmpi eq, %arg2, %c0_i32 : i32
    %1 = arith.extui %0 : i1 to i32
    %c0_i32_0 = arith.constant 0 : i32
    %2 = arith.cmpi ne, %1, %c0_i32_0 : i32
    scf.if %2 {
      %cst_10 = arith.constant 0.000000e+00 : f32
      %12 = vector.broadcast %cst_10 : f32 to vector<16x128xf32>
      %c0_11 = arith.constant 0 : index
      %c0_12 = arith.constant 0 : index
      %13 = vector.load %arg7[%c0_11, %c0_12] : memref<16x128xf32, #tpu.memory_space<vmem>>, vector<16x128xf32>
      tpu.vector_store %arg7[%c0_11, %c0_12], %12 {strides = array<i32>} : memref<16x128xf32, #tpu.memory_space<vmem>>, vector<16x128xf32>,
    } else {
    }
    %c0 = arith.constant 0 : index
    %c0_1 = arith.constant 0 : index
    %3 = vector.load %arg7[%c0, %c0_1] : memref<16x128xf32, #tpu.memory_space<vmem>>, vector<16x128xf32>
    %c0_2 = arith.constant 0 : index
    %c0_3 = arith.constant 0 : index
    %4 = vector.load %arg3[%c0_2, %c0_3] : memref<16x128xf32, #tpu.memory_space<vmem>>, vector<16x128xf32>
    %c0_4 = arith.constant 0 : index
    %c0_5 = arith.constant 0 : index
    %5 = vector.load %arg4[%c0_4, %c0_5] : memref<128x128xf32, #tpu.memory_space<vmem>>, vector<128x128xf32>
    %cst = arith.constant dense<0.000000e+00> : vector<16x128xf32>
    %6 = tpu.matmul %4, %5, %cst {dimension_numbers = #tpu.dot_dimension_numbers<[1], [0], [0], [1], [0, 0, 1, 1], [], []>} : vector<16x128xf32>, vector<128x128xf32>, vector<16x128xf32> -> vector<16x128xf32>
    %7 = arith.addf %3, %6 : vector<16x128xf32>
    %c0_6 = arith.constant 0 : index
    %c0_7 = arith.constant 0 : index
    %8 = vector.load %arg7[%c0_6, %c0_7] : memref<16x128xf32, #tpu.memory_space<vmem>>, vector<16x128xf32>
    tpu.vector_store %arg7[%c0_6, %c0_7], %7 {strides = array<i32>} : memref<16x128xf32, #tpu.memory_space<vmem>>, vector<16x128xf32>,
    %c0_i32_8 = arith.constant 0 : i32
    %9 = arith.cmpi eq, %arg2, %c0_i32_8 : i32
    %10 = arith.extui %9 : i1 to i32
    %c0_i32_9 = arith.constant 0 : i32
    %11 = arith.cmpi ne, %10, %c0_i32_9 : i32
    scf.if %11 {
      %c0_10 = arith.constant 0 : index
      %c0_11 = arith.constant 0 : index
      %12 = vector.load %arg7[%c0_10, %c0_11] : memref<16x128xf32, #tpu.memory_space<vmem>>, vector<16x128xf32>
      %c0_12 = arith.constant 0 : index
      %c0_13 = arith.constant 0 : index
      %13 = vector.load %arg5[%c0_12, %c0_13] : memref<1x128xf32, #tpu.memory_space<vmem>>, vector<1x128xf32>
      %14 = vector.broadcast %13 : vector<1x128xf32> to vector<16x128xf32>
      %15 = arith.addf %12, %14 : vector<16x128xf32>
      %c0_14 = arith.constant 0 : index
      %c0_15 = arith.constant 0 : index
      %16 = vector.load %arg6[%c0_14, %c0_15] : memref<16x128xf32, #tpu.memory_space<vmem>>, vector<16x128xf32>
      tpu.vector_store %arg6[%c0_14, %c0_15], %15 {strides = array<i32>} : memref<16x128xf32, #tpu.memory_space<vmem>>, vector<16x128xf32>,
    } else {
    }
    return
  }
  func.func @transform_0(%arg0: i32, %arg1: i32, %arg2: i32) -> (i32, i32) {
    %c0_i32 = arith.constant 0 : i32
    return %arg0, %arg2 : i32, i32
  }
  func.func @transform_1(%arg0: i32, %arg1: i32, %arg2: i32) -> (i32, i32) {
    %c0_i32 = arith.constant 0 : i32
    return %arg2, %arg1 : i32, i32
  }
  func.func @transform_2(%arg0: i32, %arg1: i32, %arg2: i32) -> (i32, i32) {
    %c0_i32 = arith.constant 0 : i32
    %c0_i32_0 = arith.constant 0 : i32
    return %c0_i32, %arg1 : i32, i32
  }
  func.func @transform_3(%arg0: i32, %arg1: i32, %arg2: i32) -> (i32, i32) {
    %c0_i32 = arith.constant 0 : i32
    return %arg0, %arg1 : i32, i32
  }
}

</mosaic_0001>

<llo_original>
// kernel: _linear_forward_2d.1
$region0: #{_linear_forward_2d.1}
  #allocation0 [shape = 'u32[]', space=smem, size = 0x4, offset = 0x4, fixed_abs, tag = 'smem constant byte address 0x4 - core index']
  #allocation1 [shape = 'u32[144,128]{1,0:T(1,128)}', space=vmem, size = 0x12000, scoped, tag = 'internal scratch']
  #allocation2 [shape = 'f32[16,128]{1,0:T(8,128)}', space=vmem, size = 0x2000, scoped, tag = 'scratch operand']
  %s0 = inlined_call_operand.vmem [shape: f32[16,128], index: 0, kind: input, shape index: {}]
  %s1 = inlined_call_operand.hbm [shape: f32[128,128], index: 1, kind: input, shape index: {}]
  %s2 = inlined_call_operand.vmem [shape: f32[1,128], index: 2, kind: input, shape index: {}]
  %s3 = inlined_call_operand.hbm [shape: f32[16,128], index: 3, kind: output, shape index: {}]
  %s4 = sld [smem:[#allocation0]]
  $region34: #{_linear_forward_2d.1} parent=0
    _
  %s6 = ssub.s32 1, %s4
  %s7 = scalar_select 0, %s6, %s4
  $region1: #{_linear_forward_2d.1} parent=0
    #allocation3 [shape = 'u8[65536]{0}', space=vmem, size = 0x10000, scoped, tag = 'input window, operand 1, single buffered']
    #allocation4 [shape = 's32[1]{0}', space=sflag, size = 0x4, scoped, tag = 'scoped memory for _linear_forward_2d.1']
    #allocation5 [shape = 's32[1]{0}', space=sflag, size = 0x4, scoped, tag = 'scoped memory for _linear_forward_2d.1']
    #allocation6 [shape = 'u8[8192]{0}', space=vmem, size = 0x2000, scoped, tag = 'output window, operand 0, single buffered']
    %8 = vsyncpa [#allocation4], 0
    %9 = vsyncpa [#allocation5], 0
    // Predicated region
    $region2: #{_linear_forward_2d.1} parent=1 // pred_check
      _
    $region3: #{_linear_forward_2d.1} parent=1 // pred_check_branch
      %11 = sbr.rel (0) target = $region5
    $region4: #{_linear_forward_2d.1} parent=1 // pred_region
      _
    $region5: #{_linear_forward_2d.1} parent=1 // pred_fallthru
      _
    // Predicated region
    $region6: #{_linear_forward_2d.1} parent=1 // pred_check
      _
    $region7: #{_linear_forward_2d.1} parent=1 // pred_check_branch
      %13 = sbr.rel (0) target = $region9
    $region8: #{_linear_forward_2d.1} parent=1 // pred_region
      %s15 = ssub.s32 2048, 2048
      %16 = vsyncadd [#allocation4], %s15
      %s17 = sshll.u32 [#allocation3], 4
      %s18 = int_to_ptr.vmem [resolvable:$true] %s17
      %23 = dma.hbm_to_vmem [thread:$0]  %s1, 2048, %s18, [#allocation4], 128, 128, 8
    $region9: #{_linear_forward_2d.1} parent=1 // pred_fallthru
      _
    // Predicated region
    $region10: #{_linear_forward_2d.1} parent=1 // pred_check
      _
    $region11: #{_linear_forward_2d.1} parent=1 // pred_check_branch
      %25 = sbr.rel (0) target = $region13
    $region12: #{_linear_forward_2d.1} parent=1 // pred_region
      _
    $region13: #{_linear_forward_2d.1} parent=1 // pred_fallthru
      _
    // Predicated region
    $region14: #{_linear_forward_2d.1} parent=1 // pred_check
      _
    $region15: #{_linear_forward_2d.1} parent=1 // pred_check_branch
      %27 = sbr.rel (0) target = $region17
    $region16: #{_linear_forward_2d.1} parent=1 // pred_region
      %28 = dma.done [#allocation4], 2048
    $region17: #{_linear_forward_2d.1} parent=1 // pred_fallthru
      _
    %p29 = scmp.eq.s32.totalorder 0, 0
    // Predicated region
    $region18: #{_linear_forward_2d.1} parent=1 // pred_check
      %p30 = pneg %p29
    $region19: #{_linear_forward_2d.1} parent=1 // pred_check_branch
      %32 = sbr.rel (%p30) target = $region21
    $region20: #{_linear_forward_2d.1} parent=1 // pred_region
      %33 = vst [vmem:[#allocation2] sm:$0xff] 0.0
      %34 = vst [vmem:[#allocation2 + $0x8] sm:$0xff] 0.0
    $region21: #{_linear_forward_2d.1} parent=1 // pred_fallthru
      _
    %v35 = vld [vmem:[#allocation2] sm:$0xff]
    %v36 = vld [vmem:[#allocation2 + $0x8] sm:$0xff]
    %v37 = vld [vmem:[%s0] sm:$0xff]
    %v38 = vld [vmem:[%s0 + $0x8] sm:$0xff]
    %v39 = vld [vmem:[#allocation3] sm:$0xff]
    %v40 = vld [vmem:[#allocation3 + $0x8] sm:$0xff]
    %v41 = vld [vmem:[#allocation3 + $0x10] sm:$0xff]
    %v42 = vld [vmem:[#allocation3 + $0x18] sm:$0xff]
    %v43 = vld [vmem:[#allocation3 + $0x20] sm:$0xff]
    %v44 = vld [vmem:[#allocation3 + $0x28] sm:$0xff]
    %v45 = vld [vmem:[#allocation3 + $0x30] sm:$0xff]
    %v46 = vld [vmem:[#allocation3 + $0x38] sm:$0xff]
    %v47 = vld [vmem:[#allocation3 + $0x40] sm:$0xff]
    %v48 = vld [vmem:[#allocation3 + $0x48] sm:$0xff]
    %v49 = vld [vmem:[#allocation3 + $0x50] sm:$0xff]
    %v50 = vld [vmem:[#allocation3 + $0x58] sm:$0xff]
    %v51 = vld [vmem:[#allocation3 + $0x60] sm:$0xff]
    %v52 = vld [vmem:[#allocation3 + $0x68] sm:$0xff]
    %v53 = vld [vmem:[#allocation3 + $0x70] sm:$0xff]
    %v54 = vld [vmem:[#allocation3 + $0x78] sm:$0xff]
    %55 = vmatprep.subr.mxu0 0.0
    %56 = vmatpush1.msra.mxu0 %v54
    %57 = vmatprep.subr.mxu0 0.0
    %58 = vmatpush1.msra.mxu0 %v53
    %59 = vmatprep.subr.mxu0 0.0
    %60 = vmatpush1.msra.mxu0 %v52
    %61 = vmatprep.subr.mxu0 0.0
    %62 = vmatpush1.msra.mxu0 %v51
    %63 = vmatprep.subr.mxu0 0.0
    %64 = vmatpush1.msra.mxu0 %v50
    %65 = vmatprep.subr.mxu0 0.0
    %66 = vmatpush1.msra.mxu0 %v49
    %67 = vmatprep.subr.mxu0 0.0
    %68 = vmatpush1.msra.mxu0 %v48
    %69 = vmatprep.subr.mxu0 0.0
    %70 = vmatpush1.msra.mxu0 %v47
    %71 = vmatprep.subr.mxu0 0.0
    %72 = vmatpush1.msra.mxu0 %v46
    %73 = vmatprep.subr.mxu0 0.0
    %74 = vmatpush1.msra.mxu0 %v45
    %75 = vmatprep.subr.mxu0 0.0
    %76 = vmatpush1.msra.mxu0 %v44
    %77 = vmatprep.subr.mxu0 0.0
    %78 = vmatpush1.msra.mxu0 %v43
    %79 = vmatprep.subr.mxu0 0.0
    %80 = vmatpush1.msra.mxu0 %v42
    %81 = vmatprep.subr.mxu0 0.0
    %82 = vmatpush1.msra.mxu0 %v41
    %83 = vmatprep.subr.mxu0 0.0
    %84 = vmatpush1.msra.mxu0 %v40
    %85 = vmatprep.subr.mxu0 0.0
    %86 = vmatpush1.msra.mxu0 %v39
    %87 = vmatprep.subr.mxu0 0.0
    %88 = vmatpush2.msra.mxu0 0.0
    %89 = vmatprep.subr.mxu0 0.0
    %90 = vmatpush2.msra.mxu0 0.0
    %91 = vmatprep.subr.mxu0 0.0
    %92 = vmatpush2.msra.mxu0 0.0
    %93 = vmatprep.subr.mxu0 0.0
    %94 = vmatpush2.msra.mxu0 0.0
    %95 = vmatprep.subr.mxu0 0.0
    %96 = vmatpush2.msra.mxu0 0.0
    %97 = vmatprep.subr.mxu0 0.0
    %98 = vmatpush2.msra.mxu0 0.0
    %99 = vmatprep.subr.mxu0 0.0
    %100 = vmatpush2.msra.mxu0 0.0
    %101 = vmatprep.subr.mxu0 0.0
    %102 = vmatpush2.msra.mxu0 0.0
    %103 = vmatprep.subr.mxu0 0.0
    %104 = vmatpush2.msra.mxu0 0.0
    %105 = vmatprep.subr.mxu0 0.0
    %106 = vmatpush2.msra.mxu0 0.0
    %107 = vmatprep.subr.mxu0 0.0
    %108 = vmatpush2.msra.mxu0 0.0
    %109 = vmatprep.subr.mxu0 0.0
    %110 = vmatpush2.msra.mxu0 0.0
    %111 = vmatprep.subr.mxu0 0.0
    %112 = vmatpush2.msra.mxu0 0.0
    %113 = vmatprep.subr.mxu0 0.0
    %114 = vmatpush2.msra.mxu0 0.0
    %115 = vmatprep.subr.mxu0 0.0
    %116 = vmatpush2.msra.mxu0 0.0
    %117 = vmatprep.subr.mxu0 0.0
    %118 = vmatpush2.msra.mxu0 0.0
    %119 = vmatprep.mubr.f32.mxu0 0.0
    %120 = vmatmul.mubr.f32.gmra.mxu0 %v37
    %v121 = vpop.f32.mrf.mxu0
    %v122 = vadd.f32 0.0, %v121
    %v123 = vpop.f32.mrf.mxu0
    %124 = vmatprep.mubr.f32.mxu0 0.0
    %125 = vmatmul.mubr.f32.gmra.mxu0 %v38
    %v126 = vpop.f32.mrf.mxu0
    %v127 = vadd.f32 0.0, %v126
    %v128 = vpop.f32.mrf.mxu0
    %129 = vdwg.mxu0
    %v130 = vadd.f32 %v35, %v122
    %v131 = vadd.f32 %v36, %v127
    %132 = vst [vmem:[#allocation2] sm:$0xff] %v130
    %133 = vst [vmem:[#allocation2 + $0x8] sm:$0xff] %v131
    // Predicated region
    $region22: #{_linear_forward_2d.1} parent=1 // pred_check
      %p134 = pneg %p29
    $region23: #{_linear_forward_2d.1} parent=1 // pred_check_branch
      %136 = sbr.rel (%p134) target = $region25
    $region24: #{_linear_forward_2d.1} parent=1 // pred_region
      %v137 = vld [vmem:[#allocation2] sm:$0xff]
      %v138 = vld [vmem:[#allocation2 + $0x8] sm:$0xff]
      %v139 = vld [vmem:[%s2] sm:$0x1]
      %v141 = vlaneseq
      %v142 = vshrl.u32 %v141, 7
      %v143 = vsub.s32 0, %v142
      %v144 = vrot.slane %v139, %v143
      %v146 = vadd.f32 %v137, %v144
      %v147 = vadd.f32 %v138, %v144
      %148 = vst [vmem:[#allocation6] sm:$0xff] %v146
      %149 = vst [vmem:[#allocation6 + $0x8] sm:$0xff] %v147
    $region25: #{_linear_forward_2d.1} parent=1 // pred_fallthru
      _
    // Predicated region
    $region26: #{_linear_forward_2d.1} parent=1 // pred_check
      _
    $region27: #{_linear_forward_2d.1} parent=1 // pred_check_branch
      %151 = sbr.rel (0) target = $region29
    $region28: #{_linear_forward_2d.1} parent=1 // pred_region
      %s153 = ssub.s32 256, 256
      %154 = vsyncadd [#allocation5], %s153
      %s155 = sshll.u32 [#allocation6], 4
      %s156 = int_to_ptr.vmem [resolvable:$true] %s155
      %161 = dma.vmem_to_hbm [thread:$0]  %s156, 256, %s3, [#allocation5], 128, 128, 8
    $region29: #{_linear_forward_2d.1} parent=1 // pred_fallthru
      _
    // Predicated region
    $region30: #{_linear_forward_2d.1} parent=1 // pred_check
      _
    $region31: #{_linear_forward_2d.1} parent=1 // pred_check_branch
      %163 = sbr.rel (0) target = $region33
    $region32: #{_linear_forward_2d.1} parent=1 // pred_region
      %164 = dma.done [#allocation5], 256
    $region33: #{_linear_forward_2d.1} parent=1 // pred_fallthru
      _
    %165 = vsyncpa [#allocation4], 1
    %166 = vsyncpa [#allocation5], 1

</llo_original>
